<compile_context>
chip_gen: v6e
topology: v6e:2x2x1
jax: 0.10.0
libtpu: 0.0.40
codegen_flags: <defaults>
</compile_context>

<pallas_src>
import functools

import jax
import jax.numpy as jnp
from jax.experimental import pallas as pl
from jax.experimental.pallas import tpu as pltpu


# Padded hidden widths (lane multiples).
H1_PAD = 256   # 250 -> 256
H2_PAD = 128   # 50  -> 128


def _round_up(x, m):
    return (x + m - 1) // m * m


def _pad2(a, rows, cols):
    return jnp.pad(a, ((0, rows - a.shape[0]), (0, cols - a.shape[1])))


def _encoder_kernel(x_ref, w2_ref, b2_ref, w3_ref, b3_ref, w4_ref, b4_ref, o_ref):
    # x_ref:  (bt, 784)       f32
    # w2_ref: (784, 256)      f32   b2_ref: (1, 256)     f32
    # w3_ref: (256, 128)      f32   b3_ref: (1, 128)     f32
    # w4_ref: (128, ko_pad)   f32   b4_ref: (1, ko_pad)  f32
    # o_ref:  (bt, ko_pad)    f32
    h = jnp.dot(x_ref[...], w2_ref[...], preferred_element_type=jnp.float32)
    h = jnp.maximum(h + b2_ref[...], 0.0)

    h = jnp.dot(h, w3_ref[...], preferred_element_type=jnp.float32)
    h = jnp.maximum(h + b3_ref[...], 0.0)

    h = jnp.dot(h, w4_ref[...], preferred_element_type=jnp.float32)
    h = jnp.maximum(h + b4_ref[...], 0.0)

    o_ref[...] = h


@functools.partial(jax.jit, static_argnames=("batch_tile",))
def encoder_forward(x_nchw, params, batch_tile=1024):
    w2, b2, w3, b3, w4, b4 = params
    B = x_nchw.shape[0]
    K = w4.shape[1]
    ko_pad = _round_up(max(K, 1), 128)

    # Same semantics as torch's x.view(B, 784); streamed in f32 (no bf16 prep pass,
    # no full-array batch pad).
    x = x_nchw.reshape(B, 784).astype(jnp.float32)

    # Batch-tile selection: large tiles amortize the ~0.35 us per-grid-step overhead,
    # but mid/large batches keep >= 2 grid steps so v7x megacore can split the batch axis.
    bt = min(batch_tile, _round_up(B, 8))
    if B > 32 and bt >= B:
        bt = _round_up((B + 1) // 2, 8)
    bt = max(8, bt)
    grid = (pl.cdiv(B, bt),)

    # Zero-pad weights/biases to lane-friendly widths. Exact through ReLU: padded output
    # columns produce relu(0) = 0 and padded input rows contribute 0 downstream.
    w2p = _pad2(w2, 784, H1_PAD).astype(jnp.float32)
    w3p = _pad2(w3, H1_PAD, H2_PAD).astype(jnp.float32)
    w4p = _pad2(w4, H2_PAD, ko_pad).astype(jnp.float32)
    b2p = _pad2(b2.reshape(1, -1), 1, H1_PAD).astype(jnp.float32)
    b3p = _pad2(b3.reshape(1, -1), 1, H2_PAD).astype(jnp.float32)
    b4p = _pad2(b4.reshape(1, -1), 1, ko_pad).astype(jnp.float32)

    # Constant block index -> weights/biases DMA'd once and stay VMEM-resident across the
    # batch grid (Pallas skips re-copy when the block index doesn't change).
    full = lambda i: (0, 0)

    flops = 2 * B * (784 * H1_PAD + H1_PAD * H2_PAD + H2_PAD * ko_pad)
    bytes_accessed = 4 * (
        B * 784 + B * ko_pad
        + 784 * H1_PAD + H1_PAD * H2_PAD + H2_PAD * ko_pad
        + H1_PAD + H2_PAD + ko_pad
    )

    out_full = pl.pallas_call(
        _encoder_kernel,
        out_shape=jax.ShapeDtypeStruct((B, ko_pad), jnp.float32),
        grid_spec=pl.GridSpec(
            grid=grid,
            in_specs=[
                pl.BlockSpec((bt, 784), lambda i: (i, 0)),
                pl.BlockSpec(w2p.shape, full),
                pl.BlockSpec(b2p.shape, full),
                pl.BlockSpec(w3p.shape, full),
                pl.BlockSpec(b3p.shape, full),
                pl.BlockSpec(w4p.shape, full),
                pl.BlockSpec(b4p.shape, full),
            ],
            out_specs=pl.BlockSpec((bt, ko_pad), lambda i: (i, 0)),
        ),
        compiler_params=pltpu.CompilerParams(
            dimension_semantics=("parallel",),
        ),
        cost_estimate=pl.CostEstimate(
            flops=flops, transcendentals=0, bytes_accessed=bytes_accessed),
    )(x, w2p, b2p, w3p, b3p, w4p, b4p)

    # Kernel stores a lane-dense 128-multiple-wide block; slice back to k here.
    return out_full[:, :K]


def init_params(key, k):
    # nn.Linear default init: U(-1/sqrt(fan_in), +1/sqrt(fan_in)); stored as (in, out).
    def linear(key, fan_in, fan_out):
        kw, kb = jax.random.split(key)
        bound = 1.0 / jnp.sqrt(fan_in)
        w = jax.random.uniform(kw, (fan_in, fan_out), jnp.float32, -bound, bound)
        b = jax.random.uniform(kb, (fan_out,), jnp.float32, -bound, bound)
        return w, b

    k2, k3, k4 = jax.random.split(key, 3)
    w2, b2 = linear(k2, 784, 250)
    w3, b3 = linear(k3, 250, 50)
    w4, b4 = linear(k4, 50, k)
    return (w2, b2, w3, b3, w4, b4)


def reference_forward(x_nchw, params):
    w2, b2, w3, b3, w4, b4 = params
    x = x_nchw.reshape(x_nchw.shape[0], 784).astype(jnp.float32)
    h = jax.nn.relu(x @ w2 + b2)
    h = jax.nn.relu(h @ w3 + b3)
    h = jax.nn.relu(h @ w4 + b4)
    return h


if __name__ == "__main__":
    key = jax.random.PRNGKey(0)
    k_param, k_x1, k_x2 = jax.random.split(key, 3)

    K = 10          # cluster count k
    params = init_params(k_param, K)

    # Case 1: small batch, single grid step.
    x1 = jax.random.normal(k_x1, (8, 1, 28, 28), jnp.float32)   # NCHW, like PyTorch MNIST
    out1 = jax.block_until_ready(encoder_forward(x1, params))
    assert out1.shape == (8, K), out1.shape
    ref1 = reference_forward(x1, params)
    # Tolerance covers TPU matmul accumulation/precision differences (both sides f32 in/out).
    assert jnp.allclose(out1, ref1, atol=2e-2, rtol=2e-2), "mismatch vs f32 reference (case 1)"

    # Case 2: ragged multi-tile batch (exercises the cdiv grid, tail-row drop, >=2 steps).
    x2 = jax.random.normal(k_x2, (37, 1, 28, 28), jnp.float32)
    out2 = jax.block_until_ready(encoder_forward(x2, params, batch_tile=16))
    assert out2.shape == (37, K), out2.shape
    ref2 = reference_forward(x2, params)
    assert jnp.allclose(out2, ref2, atol=2e-2, rtol=2e-2), "mismatch vs f32 reference (case 2)"

    print("KERNEL_OK")
</pallas_src>

<mosaic_0001>
module attributes {stable_mosaic.version = 11 : i64} {
  func.func @_encoder_kernel(%arg0: i32, %arg1: memref<8x784xf32, #tpu.memory_space<vmem>>, %arg2: memref<784x256xf32, #tpu.memory_space<vmem>>, %arg3: memref<1x256xf32, #tpu.memory_space<vmem>>, %arg4: memref<256x128xf32, #tpu.memory_space<vmem>>, %arg5: memref<1x128xf32, #tpu.memory_space<vmem>>, %arg6: memref<128x128xf32, #tpu.memory_space<vmem>>, %arg7: memref<1x128xf32, #tpu.memory_space<vmem>>, %arg8: memref<8x128xf32, #tpu.memory_space<vmem>>) attributes {dimension_semantics = [#tpu.dimension_semantics<parallel>], iteration_bounds = array<i64: 1>, scalar_prefetch = 0 : i64, scratch_operands = 0 : i64, tpu.core_type = #tpu.core_type<tc>, window_params = [{transform_indices = @transform_0, window_bounds = array<i64: 8, 784>}, {pipeline_mode = #tpu.pipeline_mode<synchronous>, transform_indices = @transform_1, window_bounds = array<i64: 784, 256>}, {pipeline_mode = #tpu.pipeline_mode<synchronous>, transform_indices = @transform_2, window_bounds = array<i64: 1, 256>}, {pipeline_mode = #tpu.pipeline_mode<synchronous>, transform_indices = @transform_3, window_bounds = array<i64: 256, 128>}, {pipeline_mode = #tpu.pipeline_mode<synchronous>, transform_indices = @transform_4, window_bounds = array<i64: 1, 128>}, {pipeline_mode = #tpu.pipeline_mode<synchronous>, transform_indices = @transform_5, window_bounds = array<i64: 128, 128>}, {pipeline_mode = #tpu.pipeline_mode<synchronous>, transform_indices = @transform_6, window_bounds = array<i64: 1, 128>}, {transform_indices = @transform_7, window_bounds = array<i64: 8, 128>}]} {
    %c0 = arith.constant 0 : index
    %c0_0 = arith.constant 0 : index
    %0 = vector.load %arg1[%c0, %c0_0] : memref<8x784xf32, #tpu.memory_space<vmem>>, vector<8x784xf32>
    %c0_1 = arith.constant 0 : index
    %c0_2 = arith.constant 0 : index
    %1 = vector.load %arg2[%c0_1, %c0_2] : memref<784x256xf32, #tpu.memory_space<vmem>>, vector<784x256xf32>
    %cst = arith.constant dense<0.000000e+00> : vector<8x256xf32>
    %2 = tpu.matmul %0, %1, %cst {dimension_numbers = #tpu.dot_dimension_numbers<[1], [0], [0], [1], [0, 0, 1, 1], [], []>} : vector<8x784xf32>, vector<784x256xf32>, vector<8x256xf32> -> vector<8x256xf32>
    %c0_3 = arith.constant 0 : index
    %c0_4 = arith.constant 0 : index
    %3 = vector.load %arg3[%c0_3, %c0_4] : memref<1x256xf32, #tpu.memory_space<vmem>>, vector<1x256xf32>
    %4 = vector.broadcast %3 : vector<1x256xf32> to vector<8x256xf32>
    %5 = arith.addf %2, %4 : vector<8x256xf32>
    %cst_5 = arith.constant 0.000000e+00 : f32
    %6 = vector.broadcast %cst_5 : f32 to vector<8x256xf32>
    %7 = arith.maximumf %5, %6 : vector<8x256xf32>
    %c0_6 = arith.constant 0 : index
    %c0_7 = arith.constant 0 : index
    %8 = vector.load %arg4[%c0_6, %c0_7] : memref<256x128xf32, #tpu.memory_space<vmem>>, vector<256x128xf32>
    %cst_8 = arith.constant dense<0.000000e+00> : vector<8x128xf32>
    %9 = tpu.matmul %7, %8, %cst_8 {dimension_numbers = #tpu.dot_dimension_numbers<[1], [0], [0], [1], [0, 0, 1, 1], [], []>} : vector<8x256xf32>, vector<256x128xf32>, vector<8x128xf32> -> vector<8x128xf32>
    %c0_9 = arith.constant 0 : index
    %c0_10 = arith.constant 0 : index
    %10 = vector.load %arg5[%c0_9, %c0_10] : memref<1x128xf32, #tpu.memory_space<vmem>>, vector<1x128xf32>
    %11 = vector.broadcast %10 : vector<1x128xf32> to vector<8x128xf32>
    %12 = arith.addf %9, %11 : vector<8x128xf32>
    %cst_11 = arith.constant 0.000000e+00 : f32
    %13 = vector.broadcast %cst_11 : f32 to vector<8x128xf32>
    %14 = arith.maximumf %12, %13 : vector<8x128xf32>
    %c0_12 = arith.constant 0 : index
    %c0_13 = arith.constant 0 : index
    %15 = vector.load %arg6[%c0_12, %c0_13] : memref<128x128xf32, #tpu.memory_space<vmem>>, vector<128x128xf32>
    %cst_14 = arith.constant dense<0.000000e+00> : vector<8x128xf32>
    %16 = tpu.matmul %14, %15, %cst_14 {dimension_numbers = #tpu.dot_dimension_numbers<[1], [0], [0], [1], [0, 0, 1, 1], [], []>} : vector<8x128xf32>, vector<128x128xf32>, vector<8x128xf32> -> vector<8x128xf32>
    %c0_15 = arith.constant 0 : index
    %c0_16 = arith.constant 0 : index
    %17 = vector.load %arg7[%c0_15, %c0_16] : memref<1x128xf32, #tpu.memory_space<vmem>>, vector<1x128xf32>
    %18 = vector.broadcast %17 : vector<1x128xf32> to vector<8x128xf32>
    %19 = arith.addf %16, %18 : vector<8x128xf32>
    %cst_17 = arith.constant 0.000000e+00 : f32
    %20 = vector.broadcast %cst_17 : f32 to vector<8x128xf32>
    %21 = arith.maximumf %19, %20 : vector<8x128xf32>
    %c0_18 = arith.constant 0 : index
    %c0_19 = arith.constant 0 : index
    %22 = vector.load %arg8[%c0_18, %c0_19] : memref<8x128xf32, #tpu.memory_space<vmem>>, vector<8x128xf32>
    tpu.vector_store %arg8[%c0_18, %c0_19], %21 {strides = array<i32>} : memref<8x128xf32, #tpu.memory_space<vmem>>, vector<8x128xf32>,
    return
  }
  func.func @transform_0(%arg0: i32) -> (i32, i32) {
    %c0_i32 = arith.constant 0 : i32
    %c0_i32_0 = arith.constant 0 : i32
    return %arg0, %c0_i32 : i32, i32
  }
  func.func @transform_1(%arg0: i32) -> (i32, i32) {
    %c0_i32 = arith.constant 0 : i32
    %c0_i32_0 = arith.constant 0 : i32
    %c0_i32_1 = arith.constant 0 : i32
    return %c0_i32, %c0_i32_0 : i32, i32
  }
  func.func @transform_2(%arg0: i32) -> (i32, i32) {
    %c0_i32 = arith.constant 0 : i32
    %c0_i32_0 = arith.constant 0 : i32
    %c0_i32_1 = arith.constant 0 : i32
    return %c0_i32, %c0_i32_0 : i32, i32
  }
  func.func @transform_3(%arg0: i32) -> (i32, i32) {
    %c0_i32 = arith.constant 0 : i32
    %c0_i32_0 = arith.constant 0 : i32
    %c0_i32_1 = arith.constant 0 : i32
    return %c0_i32, %c0_i32_0 : i32, i32
  }
  func.func @transform_4(%arg0: i32) -> (i32, i32) {
    %c0_i32 = arith.constant 0 : i32
    %c0_i32_0 = arith.constant 0 : i32
    %c0_i32_1 = arith.constant 0 : i32
    return %c0_i32, %c0_i32_0 : i32, i32
  }
  func.func @transform_5(%arg0: i32) -> (i32, i32) {
    %c0_i32 = arith.constant 0 : i32
    %c0_i32_0 = arith.constant 0 : i32
    %c0_i32_1 = arith.constant 0 : i32
    return %c0_i32, %c0_i32_0 : i32, i32
  }
  func.func @transform_6(%arg0: i32) -> (i32, i32) {
    %c0_i32 = arith.constant 0 : i32
    %c0_i32_0 = arith.constant 0 : i32
    %c0_i32_1 = arith.constant 0 : i32
    return %c0_i32, %c0_i32_0 : i32, i32
  }
  func.func @transform_7(%arg0: i32) -> (i32, i32) {
    %c0_i32 = arith.constant 0 : i32
    %c0_i32_0 = arith.constant 0 : i32
    return %arg0, %c0_i32 : i32, i32
  }
}

</mosaic_0001>

<llo_original>
// kernel: encoder_forward.1
$region0: #{encoder_forward.1}
  #allocation0 [shape = 'u32[]', space=smem, size = 0x4, offset = 0x4, fixed_abs, tag = 'smem constant byte address 0x4 - core index']
  #allocation1 [shape = 'u32[144,128]{1,0:T(1,128)}', space=vmem, size = 0x12000, scoped, tag = 'internal scratch']
  %s0 = inlined_call_operand.vmem [shape: f32[8,784], index: 0, kind: input, shape index: {}]
  %s1 = inlined_call_operand.vmem [shape: f32[784,256], index: 1, kind: input, shape index: {}]
  %s2 = inlined_call_operand.vmem [shape: f32[1,256], index: 2, kind: input, shape index: {}]
  %s3 = inlined_call_operand.vmem [shape: f32[256,128], index: 3, kind: input, shape index: {}]
  %s4 = inlined_call_operand.vmem [shape: f32[1,128], index: 4, kind: input, shape index: {}]
  %s5 = inlined_call_operand.vmem [shape: f32[128,128], index: 5, kind: input, shape index: {}]
  %s6 = inlined_call_operand.vmem [shape: f32[1,128], index: 6, kind: input, shape index: {}]
  %s7 = inlined_call_operand.hbm [shape: f32[8,128], index: 7, kind: output, shape index: {}]
  %s8 = sld [smem:[#allocation0]]
  $region38: #{encoder_forward.1} parent=0
    _
  %s10 = ssub.s32 1, %s8
  %s11 = scalar_select 0, %s10, %s8
  $region1: #{encoder_forward.1} parent=0
    #allocation2 [shape = 'u8[4096]{0}', space=vmem, size = 0x1000, scoped, tag = 'output window, operand 0, single buffered']
    #allocation3 [shape = 's32[1]{0}', space=sflag, size = 0x4, scoped, tag = 'scoped memory for encoder_forward.1']
    %12 = vsyncpa [#allocation3], 0
    // Predicated region
    $region2: #{encoder_forward.1} parent=1 // pred_check
      _
    $region3: #{encoder_forward.1} parent=1 // pred_check_branch
      %14 = sbr.rel (0) target = $region5
    $region4: #{encoder_forward.1} parent=1 // pred_region
      _
    $region5: #{encoder_forward.1} parent=1 // pred_fallthru
      _
    // Predicated region
    $region6: #{encoder_forward.1} parent=1 // pred_check
      _
    $region7: #{encoder_forward.1} parent=1 // pred_check_branch
      %16 = sbr.rel (0) target = $region9
    $region8: #{encoder_forward.1} parent=1 // pred_region
      _
    $region9: #{encoder_forward.1} parent=1 // pred_fallthru
      _
    // Predicated region
    $region10: #{encoder_forward.1} parent=1 // pred_check
      _
    $region11: #{encoder_forward.1} parent=1 // pred_check_branch
      %18 = sbr.rel (0) target = $region13
    $region12: #{encoder_forward.1} parent=1 // pred_region
      _
    $region13: #{encoder_forward.1} parent=1 // pred_fallthru
      _
    // Predicated region
    $region14: #{encoder_forward.1} parent=1 // pred_check
      _
    $region15: #{encoder_forward.1} parent=1 // pred_check_branch
      %20 = sbr.rel (0) target = $region17
    $region16: #{encoder_forward.1} parent=1 // pred_region
      _
    $region17: #{encoder_forward.1} parent=1 // pred_fallthru
      _
    // Predicated region
    $region18: #{encoder_forward.1} parent=1 // pred_check
      _
    $region19: #{encoder_forward.1} parent=1 // pred_check_branch
      %22 = sbr.rel (0) target = $region21
    $region20: #{encoder_forward.1} parent=1 // pred_region
      _
    $region21: #{encoder_forward.1} parent=1 // pred_fallthru
      _
    // Predicated region
    $region22: #{encoder_forward.1} parent=1 // pred_check
      _
    $region23: #{encoder_forward.1} parent=1 // pred_check_branch
      %24 = sbr.rel (0) target = $region25
    $region24: #{encoder_forward.1} parent=1 // pred_region
      _
    $region25: #{encoder_forward.1} parent=1 // pred_fallthru
      _
    // Predicated region
    $region26: #{encoder_forward.1} parent=1 // pred_check
      _
    $region27: #{encoder_forward.1} parent=1 // pred_check_branch
      %26 = sbr.rel (0) target = $region29
    $region28: #{encoder_forward.1} parent=1 // pred_region
      _
    $region29: #{encoder_forward.1} parent=1 // pred_fallthru
      _
    %v27 = vld [vmem:[%s0] sm:$0xff]
    %v28 = vld [vmem:[%s0 + $0x8] sm:$0xff]
    %v29 = vld [vmem:[%s0 + $0x10] sm:$0xff]
    %v30 = vld [vmem:[%s0 + $0x18] sm:$0xff]
    %v31 = vld [vmem:[%s0 + $0x20] sm:$0xff]
    %v32 = vld [vmem:[%s0 + $0x28] sm:$0xff]
    %v33 = vld [vmem:[%s0 + $0x30] sm:$0xff]
    %v34 = vld [vmem:[%s1] sm:$0xff]
    %v35 = vld [vmem:[%s1 + $0x8] sm:$0xff]
    %v36 = vld [vmem:[%s1 + $0x10] sm:$0xff]
    %v37 = vld [vmem:[%s1 + $0x18] sm:$0xff]
    %v38 = vld [vmem:[%s1 + $0x20] sm:$0xff]
    %v39 = vld [vmem:[%s1 + $0x28] sm:$0xff]
    %v40 = vld [vmem:[%s1 + $0x30] sm:$0xff]
    %v41 = vld [vmem:[%s1 + $0x38] sm:$0xff]
    %v42 = vld [vmem:[%s1 + $0x40] sm:$0xff]
    %v43 = vld [vmem:[%s1 + $0x48] sm:$0xff]
    %v44 = vld [vmem:[%s1 + $0x50] sm:$0xff]
    %v45 = vld [vmem:[%s1 + $0x58] sm:$0xff]
    %v46 = vld [vmem:[%s1 + $0x60] sm:$0xff]
    %v47 = vld [vmem:[%s1 + $0x68] sm:$0xff]
    %v48 = vld [vmem:[%s1 + $0x70] sm:$0xff]
    %v49 = vld [vmem:[%s1 + $0x78] sm:$0xff]
    %v50 = vld [vmem:[%s1 + $0x80] sm:$0xff]
    %v51 = vld [vmem:[%s1 + $0x88] sm:$0xff]
    %v52 = vld [vmem:[%s1 + $0x90] sm:$0xff]
    %v53 = vld [vmem:[%s1 + $0x98] sm:$0xff]
    %v54 = vld [vmem:[%s1 + $0xa0] sm:$0xff]
    %v55 = vld [vmem:[%s1 + $0xa8] sm:$0xff]
    %v56 = vld [vmem:[%s1 + $0xb0] sm:$0xff]
    %v57 = vld [vmem:[%s1 + $0xb8] sm:$0xff]
    %v58 = vld [vmem:[%s1 + $0xc0] sm:$0xff]
    %v59 = vld [vmem:[%s1 + $0xc8] sm:$0xff]
    %v60 = vld [vmem:[%s1 + $0xd0] sm:$0xff]
    %v61 = vld [vmem:[%s1 + $0xd8] sm:$0xff]
    %v62 = vld [vmem:[%s1 + $0xe0] sm:$0xff]
    %v63 = vld [vmem:[%s1 + $0xe8] sm:$0xff]
    %v64 = vld [vmem:[%s1 + $0xf0] sm:$0xff]
    %v65 = vld [vmem:[%s1 + $0xf8] sm:$0xff]
    %v66 = vld [vmem:[%s1 + $0x100] sm:$0xff]
    %v67 = vld [vmem:[%s1 + $0x108] sm:$0xff]
    %v68 = vld [vmem:[%s1 + $0x110] sm:$0xff]
    %v69 = vld [vmem:[%s1 + $0x118] sm:$0xff]
    %v70 = vld [vmem:[%s1 + $0x120] sm:$0xff]
    %v71 = vld [vmem:[%s1 + $0x128] sm:$0xff]
    %v72 = vld [vmem:[%s1 + $0x130] sm:$0xff]
    %v73 = vld [vmem:[%s1 + $0x138] sm:$0xff]
    %v74 = vld [vmem:[%s1 + $0x140] sm:$0xff]
    %v75 = vld [vmem:[%s1 + $0x148] sm:$0xff]
    %v76 = vld [vmem:[%s1 + $0x150] sm:$0xff]
    %v77 = vld [vmem:[%s1 + $0x158] sm:$0xff]
    %v78 = vld [vmem:[%s1 + $0x160] sm:$0xff]
    %v79 = vld [vmem:[%s1 + $0x168] sm:$0xff]
    %v80 = vld [vmem:[%s1 + $0x170] sm:$0xff]
    %v81 = vld [vmem:[%s1 + $0x178] sm:$0xff]
    %v82 = vld [vmem:[%s1 + $0x180] sm:$0xff]
    %v83 = vld [vmem:[%s1 + $0x188] sm:$0xff]
    %v84 = vld [vmem:[%s1 + $0x190] sm:$0xff]
    %v85 = vld [vmem:[%s1 + $0x198] sm:$0xff]
    %v86 = vld [vmem:[%s1 + $0x1a0] sm:$0xff]
    %v87 = vld [vmem:[%s1 + $0x1a8] sm:$0xff]
    %v88 = vld [vmem:[%s1 + $0x1b0] sm:$0xff]
    %v89 = vld [vmem:[%s1 + $0x1b8] sm:$0xff]
    %v90 = vld [vmem:[%s1 + $0x1c0] sm:$0xff]
    %v91 = vld [vmem:[%s1 + $0x1c8] sm:$0xff]
    %v92 = vld [vmem:[%s1 + $0x1d0] sm:$0xff]
    %v93 = vld [vmem:[%s1 + $0x1d8] sm:$0xff]
    %v94 = vld [vmem:[%s1 + $0x1e0] sm:$0xff]
    %v95 = vld [vmem:[%s1 + $0x1e8] sm:$0xff]
    %v96 = vld [vmem:[%s1 + $0x1f0] sm:$0xff]
    %v97 = vld [vmem:[%s1 + $0x1f8] sm:$0xff]
    %v98 = vld [vmem:[%s1 + $0x200] sm:$0xff]
    %v99 = vld [vmem:[%s1 + $0x208] sm:$0xff]
    %v100 = vld [vmem:[%s1 + $0x210] sm:$0xff]
    %v101 = vld [vmem:[%s1 + $0x218] sm:$0xff]
    %v102 = vld [vmem:[%s1 + $0x220] sm:$0xff]
    %v103 = vld [vmem:[%s1 + $0x228] sm:$0xff]
    %v104 = vld [vmem:[%s1 + $0x230] sm:$0xff]
    %v105 = vld [vmem:[%s1 + $0x238] sm:$0xff]
    %v106 = vld [vmem:[%s1 + $0x240] sm:$0xff]
    %v107 = vld [vmem:[%s1 + $0x248] sm:$0xff]
    %v108 = vld [vmem:[%s1 + $0x250] sm:$0xff]
    %v109 = vld [vmem:[%s1 + $0x258] sm:$0xff]
    %v110 = vld [vmem:[%s1 + $0x260] sm:$0xff]
    %v111 = vld [vmem:[%s1 + $0x268] sm:$0xff]
    %v112 = vld [vmem:[%s1 + $0x270] sm:$0xff]
    %v113 = vld [vmem:[%s1 + $0x278] sm:$0xff]
    %v114 = vld [vmem:[%s1 + $0x280] sm:$0xff]
    %v115 = vld [vmem:[%s1 + $0x288] sm:$0xff]
    %v116 = vld [vmem:[%s1 + $0x290] sm:$0xff]
    %v117 = vld [vmem:[%s1 + $0x298] sm:$0xff]
    %v118 = vld [vmem:[%s1 + $0x2a0] sm:$0xff]
    %v119 = vld [vmem:[%s1 + $0x2a8] sm:$0xff]
    %v120 = vld [vmem:[%s1 + $0x2b0] sm:$0xff]
    %v121 = vld [vmem:[%s1 + $0x2b8] sm:$0xff]
    %v122 = vld [vmem:[%s1 + $0x2c0] sm:$0xff]
    %v123 = vld [vmem:[%s1 + $0x2c8] sm:$0xff]
    %v124 = vld [vmem:[%s1 + $0x2d0] sm:$0xff]
    %v125 = vld [vmem:[%s1 + $0x2d8] sm:$0xff]
    %v126 = vld [vmem:[%s1 + $0x2e0] sm:$0xff]
    %v127 = vld [vmem:[%s1 + $0x2e8] sm:$0xff]
    %v128 = vld [vmem:[%s1 + $0x2f0] sm:$0xff]
    %v129 = vld [vmem:[%s1 + $0x2f8] sm:$0xff]
    %v130 = vld [vmem:[%s1 + $0x300] sm:$0xff]
    %v131 = vld [vmem:[%s1 + $0x308] sm:$0xff]
    %v132 = vld [vmem:[%s1 + $0x310] sm:$0xff]
    %v133 = vld [vmem:[%s1 + $0x318] sm:$0xff]
    %v134 = vld [vmem:[%s1 + $0x320] sm:$0xff]
    %v135 = vld [vmem:[%s1 + $0x328] sm:$0xff]
    %v136 = vld [vmem:[%s1 + $0x330] sm:$0xff]
    %v137 = vld [vmem:[%s1 + $0x338] sm:$0xff]
    %v138 = vld [vmem:[%s1 + $0x340] sm:$0xff]
    %v139 = vld [vmem:[%s1 + $0x348] sm:$0xff]
    %v140 = vld [vmem:[%s1 + $0x350] sm:$0xff]
    %v141 = vld [vmem:[%s1 + $0x358] sm:$0xff]
    %v142 = vld [vmem:[%s1 + $0x360] sm:$0xff]
    %v143 = vld [vmem:[%s1 + $0x368] sm:$0xff]
    %v144 = vld [vmem:[%s1 + $0x370] sm:$0xff]
    %v145 = vld [vmem:[%s1 + $0x378] sm:$0xff]
    %v146 = vld [vmem:[%s1 + $0x380] sm:$0xff]
    %v147 = vld [vmem:[%s1 + $0x388] sm:$0xff]
    %v148 = vld [vmem:[%s1 + $0x390] sm:$0xff]
    %v149 = vld [vmem:[%s1 + $0x398] sm:$0xff]
    %v150 = vld [vmem:[%s1 + $0x3a0] sm:$0xff]
    %v151 = vld [vmem:[%s1 + $0x3a8] sm:$0xff]
    %v152 = vld [vmem:[%s1 + $0x3b0] sm:$0xff]
    %v153 = vld [vmem:[%s1 + $0x3b8] sm:$0xff]
    %v154 = vld [vmem:[%s1 + $0x3c0] sm:$0xff]
    %v155 = vld [vmem:[%s1 + $0x3c8] sm:$0xff]
    %v156 = vld [vmem:[%s1 + $0x3d0] sm:$0xff]
    %v157 = vld [vmem:[%s1 + $0x3d8] sm:$0xff]
    %v158 = vld [vmem:[%s1 + $0x3e0] sm:$0xff]
    %v159 = vld [vmem:[%s1 + $0x3e8] sm:$0xff]
    %v160 = vld [vmem:[%s1 + $0x3f0] sm:$0xff]
    %v161 = vld [vmem:[%s1 + $0x3f8] sm:$0xff]
    %v162 = vld [vmem:[%s1 + $0x400] sm:$0xff]
    %v163 = vld [vmem:[%s1 + $0x408] sm:$0xff]
    %v164 = vld [vmem:[%s1 + $0x410] sm:$0xff]
    %v165 = vld [vmem:[%s1 + $0x418] sm:$0xff]
    %v166 = vld [vmem:[%s1 + $0x420] sm:$0xff]
    %v167 = vld [vmem:[%s1 + $0x428] sm:$0xff]
    %v168 = vld [vmem:[%s1 + $0x430] sm:$0xff]
    %v169 = vld [vmem:[%s1 + $0x438] sm:$0xff]
    %v170 = vld [vmem:[%s1 + $0x440] sm:$0xff]
    %v171 = vld [vmem:[%s1 + $0x448] sm:$0xff]
    %v172 = vld [vmem:[%s1 + $0x450] sm:$0xff]
    %v173 = vld [vmem:[%s1 + $0x458] sm:$0xff]
    %v174 = vld [vmem:[%s1 + $0x460] sm:$0xff]
    %v175 = vld [vmem:[%s1 + $0x468] sm:$0xff]
    %v176 = vld [vmem:[%s1 + $0x470] sm:$0xff]
    %v177 = vld [vmem:[%s1 + $0x478] sm:$0xff]
    %v178 = vld [vmem:[%s1 + $0x480] sm:$0xff]
    %v179 = vld [vmem:[%s1 + $0x488] sm:$0xff]
    %v180 = vld [vmem:[%s1 + $0x490] sm:$0xff]
    %v181 = vld [vmem:[%s1 + $0x498] sm:$0xff]
    %v182 = vld [vmem:[%s1 + $0x4a0] sm:$0xff]
    %v183 = vld [vmem:[%s1 + $0x4a8] sm:$0xff]
    %v184 = vld [vmem:[%s1 + $0x4b0] sm:$0xff]
    %v185 = vld [vmem:[%s1 + $0x4b8] sm:$0xff]
    %v186 = vld [vmem:[%s1 + $0x4c0] sm:$0xff]
    %v187 = vld [vmem:[%s1 + $0x4c8] sm:$0xff]
    %v188 = vld [vmem:[%s1 + $0x4d0] sm:$0xff]
    %v189 = vld [vmem:[%s1 + $0x4d8] sm:$0xff]
    %v190 = vld [vmem:[%s1 + $0x4e0] sm:$0xff]
    %v191 = vld [vmem:[%s1 + $0x4e8] sm:$0xff]
    %v192 = vld [vmem:[%s1 + $0x4f0] sm:$0xff]
    %v193 = vld [vmem:[%s1 + $0x4f8] sm:$0xff]
    %v194 = vld [vmem:[%s1 + $0x500] sm:$0xff]
    %v195 = vld [vmem:[%s1 + $0x508] sm:$0xff]
    %v196 = vld [vmem:[%s1 + $0x510] sm:$0xff]
    %v197 = vld [vmem:[%s1 + $0x518] sm:$0xff]
    %v198 = vld [vmem:[%s1 + $0x520] sm:$0xff]
    %v199 = vld [vmem:[%s1 + $0x528] sm:$0xff]
    %v200 = vld [vmem:[%s1 + $0x530] sm:$0xff]
    %v201 = vld [vmem:[%s1 + $0x538] sm:$0xff]
    %v202 = vld [vmem:[%s1 + $0x540] sm:$0xff]
    %v203 = vld [vmem:[%s1 + $0x548] sm:$0xff]
    %v204 = vld [vmem:[%s1 + $0x550] sm:$0xff]
    %v205 = vld [vmem:[%s1 + $0x558] sm:$0xff]
    %v206 = vld [vmem:[%s1 + $0x560] sm:$0xff]
    %v207 = vld [vmem:[%s1 + $0x568] sm:$0xff]
    %v208 = vld [vmem:[%s1 + $0x570] sm:$0xff]
    %v209 = vld [vmem:[%s1 + $0x578] sm:$0xff]
    %v210 = vld [vmem:[%s1 + $0x580] sm:$0xff]
    %v211 = vld [vmem:[%s1 + $0x588] sm:$0xff]
    %v212 = vld [vmem:[%s1 + $0x590] sm:$0xff]
    %v213 = vld [vmem:[%s1 + $0x598] sm:$0xff]
    %v214 = vld [vmem:[%s1 + $0x5a0] sm:$0xff]
    %v215 = vld [vmem:[%s1 + $0x5a8] sm:$0xff]
    %v216 = vld [vmem:[%s1 + $0x5b0] sm:$0xff]
    %v217 = vld [vmem:[%s1 + $0x5b8] sm:$0xff]
    %v218 = vld [vmem:[%s1 + $0x5c0] sm:$0xff]
    %v219 = vld [vmem:[%s1 + $0x5c8] sm:$0xff]
    %v220 = vld [vmem:[%s1 + $0x5d0] sm:$0xff]
    %v221 = vld [vmem:[%s1 + $0x5d8] sm:$0xff]
    %v222 = vld [vmem:[%s1 + $0x5e0] sm:$0xff]
    %v223 = vld [vmem:[%s1 + $0x5e8] sm:$0xff]
    %v224 = vld [vmem:[%s1 + $0x5f0] sm:$0xff]
    %v225 = vld [vmem:[%s1 + $0x5f8] sm:$0xff]
    %v226 = vld [vmem:[%s1 + $0x600] sm:$0xff]
    %v227 = vld [vmem:[%s1 + $0x608] sm:$0xff]
    %v228 = vld [vmem:[%s1 + $0x610] sm:$0xff]
    %v229 = vld [vmem:[%s1 + $0x618] sm:$0xff]
    %v230 = vld [vmem:[%s2] sm:$0x3]
    %v232 = vlaneseq
    %v233 = vshrl.u32 %v232, 7
    %v234 = vsub.s32 0, %v233
    %v235 = vrot.slane %v230, %v234
    %v236 = vlaneseq
    %v237 = vshrl.u32 %v236, 7
    %v238 = vsub.s32 1, %v237
    %v239 = vrot.slane %v230, %v238
    %vm242 = vcmask 130048
    %v244 = vsel %vm242, %v33, 0
    %246 = vmatprep.subr.mxu0 %v65
    %247 = vmatpush1.msra.mxu0 %v64
    %248 = vmatprep.subr.mxu0 %v63
    %249 = vmatpush1.msra.mxu0 %v62
    %250 = vmatprep.subr.mxu0 %v61
    %251 = vmatpush1.msra.mxu0 %v60
    %252 = vmatprep.subr.mxu0 %v59
    %253 = vmatpush1.msra.mxu0 %v58
    %254 = vmatprep.subr.mxu0 %v57
    %255 = vmatpush1.msra.mxu0 %v56
    %256 = vmatprep.subr.mxu0 %v55
    %257 = vmatpush1.msra.mxu0 %v54
    %258 = vmatprep.subr.mxu0 %v53
    %259 = vmatpush1.msra.mxu0 %v52
    %260 = vmatprep.subr.mxu0 %v51
    %261 = vmatpush1.msra.mxu0 %v50
    %262 = vmatprep.subr.mxu0 %v49
    %263 = vmatpush1.msra.mxu0 %v48
    %264 = vmatprep.subr.mxu0 %v47
    %265 = vmatpush1.msra.mxu0 %v46
    %266 = vmatprep.subr.mxu0 %v45
    %267 = vmatpush1.msra.mxu0 %v44
    %268 = vmatprep.subr.mxu0 %v43
    %269 = vmatpush1.msra.mxu0 %v42
    %270 = vmatprep.subr.mxu0 %v41
    %271 = vmatpush1.msra.mxu0 %v40
    %272 = vmatprep.subr.mxu0 %v39
    %273 = vmatpush1.msra.mxu0 %v38
    %274 = vmatprep.subr.mxu0 %v37
    %275 = vmatpush1.msra.mxu0 %v36
    %276 = vmatprep.subr.mxu0 %v35
    %277 = vmatpush1.msra.mxu0 %v34
    %278 = vmatprep.subr.mxu0 %v97
    %279 = vmatpush2.msra.mxu0 %v96
    %280 = vmatprep.subr.mxu0 %v95
    %281 = vmatpush2.msra.mxu0 %v94
    %282 = vmatprep.subr.mxu0 %v93
    %283 = vmatpush2.msra.mxu0 %v92
    %284 = vmatprep.subr.mxu0 %v91
    %285 = vmatpush2.msra.mxu0 %v90
    %286 = vmatprep.subr.mxu0 %v89
    %287 = vmatpush2.msra.mxu0 %v88
    %288 = vmatprep.subr.mxu0 %v87
    %289 = vmatpush2.msra.mxu0 %v86
    %290 = vmatprep.subr.mxu0 %v85
    %291 = vmatpush2.msra.mxu0 %v84
    %292 = vmatprep.subr.mxu0 %v83
    %293 = vmatpush2.msra.mxu0 %v82
    %294 = vmatprep.subr.mxu0 %v81
    %295 = vmatpush2.msra.mxu0 %v80
    %296 = vmatprep.subr.mxu0 %v79
    %297 = vmatpush2.msra.mxu0 %v78
    %298 = vmatprep.subr.mxu0 %v77
    %299 = vmatpush2.msra.mxu0 %v76
    %300 = vmatprep.subr.mxu0 %v75
    %301 = vmatpush2.msra.mxu0 %v74
    %302 = vmatprep.subr.mxu0 %v73
    %303 = vmatpush2.msra.mxu0 %v72
    %304 = vmatprep.subr.mxu0 %v71
    %305 = vmatpush2.msra.mxu0 %v70
    %306 = vmatprep.subr.mxu0 %v69
    %307 = vmatpush2.msra.mxu0 %v68
    %308 = vmatprep.subr.mxu0 %v67
    %309 = vmatpush2.msra.mxu0 %v66
    %310 = vmatprep.mubr.f32.mxu0 %v28
    %311 = vmatmul.mubr.f32.gmra.mxu0 %v27
    %v312 = vpop.f32.mrf.mxu0
    %v313 = vadd.f32 %v235, %v312
    %v314 = vpop.f32.mrf.mxu0
    %v315 = vadd.f32 %v239, %v314
    %316 = vdwg.mxu0
    %317 = vmatprep.subr.mxu0 %v129
    %318 = vmatpush1.msra.mxu0 %v128
    %319 = vmatprep.subr.mxu0 %v127
    %320 = vmatpush1.msra.mxu0 %v126
    %321 = vmatprep.subr.mxu0 %v125
    %322 = vmatpush1.msra.mxu0 %v124
    %323 = vmatprep.subr.mxu0 %v123
    %324 = vmatpush1.msra.mxu0 %v122
    %325 = vmatprep.subr.mxu0 %v121
    %326 = vmatpush1.msra.mxu0 %v120
    %327 = vmatprep.subr.mxu0 %v119
    %328 = vmatpush1.msra.mxu0 %v118
    %329 = vmatprep.subr.mxu0 %v117
    %330 = vmatpush1.msra.mxu0 %v116
    %331 = vmatprep.subr.mxu0 %v115
    %332 = vmatpush1.msra.mxu0 %v114
    %333 = vmatprep.subr.mxu0 %v113
    %334 = vmatpush1.msra.mxu0 %v112
    %335 = vmatprep.subr.mxu0 %v111
    %336 = vmatpush1.msra.mxu0 %v110
    %337 = vmatprep.subr.mxu0 %v109
    %338 = vmatpush1.msra.mxu0 %v108
    %339 = vmatprep.subr.mxu0 %v107
    %340 = vmatpush1.msra.mxu0 %v106
    %341 = vmatprep.subr.mxu0 %v105
    %342 = vmatpush1.msra.mxu0 %v104
    %343 = vmatprep.subr.mxu0 %v103
    %344 = vmatpush1.msra.mxu0 %v102
    %345 = vmatprep.subr.mxu0 %v101
    %346 = vmatpush1.msra.mxu0 %v100
    %347 = vmatprep.subr.mxu0 %v99
    %348 = vmatpush1.msra.mxu0 %v98
    %349 = vmatprep.subr.mxu0 %v161
    %350 = vmatpush2.msra.mxu0 %v160
    %351 = vmatprep.subr.mxu0 %v159
    %352 = vmatpush2.msra.mxu0 %v158
    %353 = vmatprep.subr.mxu0 %v157
    %354 = vmatpush2.msra.mxu0 %v156
    %355 = vmatprep.subr.mxu0 %v155
    %356 = vmatpush2.msra.mxu0 %v154
    %357 = vmatprep.subr.mxu0 %v153
    %358 = vmatpush2.msra.mxu0 %v152
    %359 = vmatprep.subr.mxu0 %v151
    %360 = vmatpush2.msra.mxu0 %v150
    %361 = vmatprep.subr.mxu0 %v149
    %362 = vmatpush2.msra.mxu0 %v148
    %363 = vmatprep.subr.mxu0 %v147
    %364 = vmatpush2.msra.mxu0 %v146
    %365 = vmatprep.subr.mxu0 %v145
    %366 = vmatpush2.msra.mxu0 %v144
    %367 = vmatprep.subr.mxu0 %v143
    %368 = vmatpush2.msra.mxu0 %v142
    %369 = vmatprep.subr.mxu0 %v141
    %370 = vmatpush2.msra.mxu0 %v140
    %371 = vmatprep.subr.mxu0 %v139
    %372 = vmatpush2.msra.mxu0 %v138
    %373 = vmatprep.subr.mxu0 %v137
    %374 = vmatpush2.msra.mxu0 %v136
    %375 = vmatprep.subr.mxu0 %v135
    %376 = vmatpush2.msra.mxu0 %v134
    %377 = vmatprep.subr.mxu0 %v133
    %378 = vmatpush2.msra.mxu0 %v132
    %379 = vmatprep.subr.mxu0 %v131
    %380 = vmatpush2.msra.mxu0 %v130
    %381 = vmatprep.mubr.f32.mxu0 %v30
    %382 = vmatmul.mubr.f32.gmra.mxu0 %v29
    %v383 = vpop.f32.mrf.mxu0
    %v384 = vadd.f32 %v313, %v383
    %v385 = vpop.f32.mrf.mxu0
    %v386 = vadd.f32 %v315, %v385
    %387 = vdwg.mxu0
    %388 = vmatprep.subr.mxu0 %v193
    %389 = vmatpush1.msra.mxu0 %v192
    %390 = vmatprep.subr.mxu0 %v191
    %391 = vmatpush1.msra.mxu0 %v190
    %392 = vmatprep.subr.mxu0 %v189
    %393 = vmatpush1.msra.mxu0 %v188
    %394 = vmatprep.subr.mxu0 %v187
    %395 = vmatpush1.msra.mxu0 %v186
    %396 = vmatprep.subr.mxu0 %v185
    %397 = vmatpush1.msra.mxu0 %v184
    %398 = vmatprep.subr.mxu0 %v183
    %399 = vmatpush1.msra.mxu0 %v182
    %400 = vmatprep.subr.mxu0 %v181
    %401 = vmatpush1.msra.mxu0 %v180
    %402 = vmatprep.subr.mxu0 %v179
    %403 = vmatpush1.msra.mxu0 %v178
    %404 = vmatprep.subr.mxu0 %v177
    %405 = vmatpush1.msra.mxu0 %v176
    %406 = vmatprep.subr.mxu0 %v175
    %407 = vmatpush1.msra.mxu0 %v174
    %408 = vmatprep.subr.mxu0 %v173
    %409 = vmatpush1.msra.mxu0 %v172
    %410 = vmatprep.subr.mxu0 %v171
    %411 = vmatpush1.msra.mxu0 %v170
    %412 = vmatprep.subr.mxu0 %v169
    %413 = vmatpush1.msra.mxu0 %v168
    %414 = vmatprep.subr.mxu0 %v167
    %415 = vmatpush1.msra.mxu0 %v166
    %416 = vmatprep.subr.mxu0 %v165
    %417 = vmatpush1.msra.mxu0 %v164
    %418 = vmatprep.subr.mxu0 %v163
    %419 = vmatpush1.msra.mxu0 %v162
    %420 = vmatprep.subr.mxu0 %v225
    %421 = vmatpush2.msra.mxu0 %v224
    %422 = vmatprep.subr.mxu0 %v223
    %423 = vmatpush2.msra.mxu0 %v222
    %424 = vmatprep.subr.mxu0 %v221
    %425 = vmatpush2.msra.mxu0 %v220
    %426 = vmatprep.subr.mxu0 %v219
    %427 = vmatpush2.msra.mxu0 %v218
    %428 = vmatprep.subr.mxu0 %v217
    %429 = vmatpush2.msra.mxu0 %v216
    %430 = vmatprep.subr.mxu0 %v215
    %431 = vmatpush2.msra.mxu0 %v214
    %432 = vmatprep.subr.mxu0 %v213
    %433 = vmatpush2.msra.mxu0 %v212
    %434 = vmatprep.subr.mxu0 %v211
    %435 = vmatpush2.msra.mxu0 %v210
    %436 = vmatprep.subr.mxu0 %v209
    %437 = vmatpush2.msra.mxu0 %v208
    %438 = vmatprep.subr.mxu0 %v207
    %439 = vmatpush2.msra.mxu0 %v206
    %440 = vmatprep.subr.mxu0 %v205
    %441 = vmatpush2.msra.mxu0 %v204
    %442 = vmatprep.subr.mxu0 %v203
    %443 = vmatpush2.msra.mxu0 %v202
    %444 = vmatprep.subr.mxu0 %v201
    %445 = vmatpush2.msra.mxu0 %v200
    %446 = vmatprep.subr.mxu0 %v199
    %447 = vmatpush2.msra.mxu0 %v198
    %448 = vmatprep.subr.mxu0 %v197
    %449 = vmatpush2.msra.mxu0 %v196
    %450 = vmatprep.subr.mxu0 %v195
    %451 = vmatpush2.msra.mxu0 %v194
    %452 = vmatprep.mubr.f32.mxu0 %v32
    %453 = vmatmul.mubr.f32.gmra.mxu0 %v31
    %v454 = vpop.f32.mrf.mxu0
    %v455 = vadd.f32 %v384, %v454
    %v456 = vpop.f32.mrf.mxu0
    %v457 = vadd.f32 %v386, %v456
    %458 = vdwg.mxu0
    %459 = vmatprep.subr.mxu0 0.0
    %460 = vmatpush1.msra.mxu0 0.0
    %461 = vmatprep.subr.mxu0 0.0
    %462 = vmatpush1.msra.mxu0 0.0
    %463 = vmatprep.subr.mxu0 0.0
    %464 = vmatpush1.msra.mxu0 0.0
    %465 = vmatprep.subr.mxu0 0.0
    %466 = vmatpush1.msra.mxu0 0.0
    %467 = vmatprep.subr.mxu0 0.0
    %468 = vmatpush1.msra.mxu0 0.0
    %469 = vmatprep.subr.mxu0 0.0
    %470 = vmatpush1.msra.mxu0 0.0
    %471 = vmatprep.subr.mxu0 0.0
    %472 = vmatpush1.msra.mxu0 0.0
    %473 = vmatprep.subr.mxu0 0.0
    %474 = vmatpush1.msra.mxu0 0.0
    %475 = vmatprep.subr.mxu0 0.0
    %476 = vmatpush1.msra.mxu0 0.0
    %477 = vmatprep.subr.mxu0 0.0
    %478 = vmatpush1.msra.mxu0 0.0
    %479 = vmatprep.subr.mxu0 0.0
    %480 = vmatpush1.msra.mxu0 0.0
    %481 = vmatprep.subr.mxu0 0.0
    %482 = vmatpush1.msra.mxu0 0.0
    %483 = vmatprep.subr.mxu0 0.0
    %484 = vmatpush1.msra.mxu0 0.0
    %485 = vmatprep.subr.mxu0 0.0
    %486 = vmatpush1.msra.mxu0 0.0
    %487 = vmatprep.subr.mxu0 %v229
    %488 = vmatpush1.msra.mxu0 %v228
    %489 = vmatprep.subr.mxu0 %v227
    %490 = vmatpush1.msra.mxu0 %v226
    %491 = vmatprep.subr.mxu0 0.0
    %492 = vmatpush2.msra.mxu0 0.0
    %493 = vmatprep.subr.mxu0 0.0
    %494 = vmatpush2.msra.mxu0 0.0
    %495 = vmatprep.subr.mxu0 0.0
    %496 = vmatpush2.msra.mxu0 0.0
    %497 = vmatprep.subr.mxu0 0.0
    %498 = vmatpush2.msra.mxu0 0.0
    %499 = vmatprep.subr.mxu0 0.0
    %500 = vmatpush2.msra.mxu0 0.0
    %501 = vmatprep.subr.mxu0 0.0
    %502 = vmatpush2.msra.mxu0 0.0
    %503 = vmatprep.subr.mxu0 0.0
    %504 = vmatpush2.msra.mxu0 0.0
    %505 = vmatprep.subr.mxu0 0.0
    %506 = vmatpush2.msra.mxu0 0.0
    %507 = vmatprep.subr.mxu0 0.0
    %508 = vmatpush2.msra.mxu0 0.0
    %509 = vmatprep.subr.mxu0 0.0
    %510 = vmatpush2.msra.mxu0 0.0
    %511 = vmatprep.subr.mxu0 0.0
    %512 = vmatpush2.msra.mxu0 0.0
    %513 = vmatprep.subr.mxu0 0.0
    %514 = vmatpush2.msra.mxu0 0.0
    %515 = vmatprep.subr.mxu0 0.0
    %516 = vmatpush2.msra.mxu0 0.0
    %517 = vmatprep.subr.mxu0 0.0
    %518 = vmatpush2.msra.mxu0 0.0
    %519 = vmatprep.subr.mxu0 0.0
    %520 = vmatpush2.msra.mxu0 0.0
    %521 = vmatprep.subr.mxu0 0.0
    %522 = vmatpush2.msra.mxu0 0.0
    %523 = vmatprep.mubr.f32.mxu0 0.0
    %524 = vmatmul.mubr.f32.gmra.mxu0 %v244
    %v525 = vpop.f32.mrf.mxu0
    %v526 = vadd.f32 %v455, %v525
    %v527 = vpop.f32.mrf.mxu0
    %v528 = vadd.f32 %v457, %v527
    %529 = vdwg.mxu0
    %v530 = vmax.f32 %v526, 0.0
    %v531 = vmax.f32 %v528, 0.0
    %v532 = vld [vmem:[%s3] sm:$0xff]
    %v533 = vld [vmem:[%s3 + $0x8] sm:$0xff]
    %v534 = vld [vmem:[%s3 + $0x10] sm:$0xff]
    %v535 = vld [vmem:[%s3 + $0x18] sm:$0xff]
    %v536 = vld [vmem:[%s3 + $0x20] sm:$0xff]
    %v537 = vld [vmem:[%s3 + $0x28] sm:$0xff]
    %v538 = vld [vmem:[%s3 + $0x30] sm:$0xff]
    %v539 = vld [vmem:[%s3 + $0x38] sm:$0xff]
    %v540 = vld [vmem:[%s3 + $0x40] sm:$0xff]
    %v541 = vld [vmem:[%s3 + $0x48] sm:$0xff]
    %v542 = vld [vmem:[%s3 + $0x50] sm:$0xff]
    %v543 = vld [vmem:[%s3 + $0x58] sm:$0xff]
    %v544 = vld [vmem:[%s3 + $0x60] sm:$0xff]
    %v545 = vld [vmem:[%s3 + $0x68] sm:$0xff]
    %v546 = vld [vmem:[%s3 + $0x70] sm:$0xff]
    %v547 = vld [vmem:[%s3 + $0x78] sm:$0xff]
    %v548 = vld [vmem:[%s3 + $0x80] sm:$0xff]
    %v549 = vld [vmem:[%s3 + $0x88] sm:$0xff]
    %v550 = vld [vmem:[%s3 + $0x90] sm:$0xff]
    %v551 = vld [vmem:[%s3 + $0x98] sm:$0xff]
    %v552 = vld [vmem:[%s3 + $0xa0] sm:$0xff]
    %v553 = vld [vmem:[%s3 + $0xa8] sm:$0xff]
    %v554 = vld [vmem:[%s3 + $0xb0] sm:$0xff]
    %v555 = vld [vmem:[%s3 + $0xb8] sm:$0xff]
    %v556 = vld [vmem:[%s3 + $0xc0] sm:$0xff]
    %v557 = vld [vmem:[%s3 + $0xc8] sm:$0xff]
    %v558 = vld [vmem:[%s3 + $0xd0] sm:$0xff]
    %v559 = vld [vmem:[%s3 + $0xd8] sm:$0xff]
    %v560 = vld [vmem:[%s3 + $0xe0] sm:$0xff]
    %v561 = vld [vmem:[%s3 + $0xe8] sm:$0xff]
    %v562 = vld [vmem:[%s3 + $0xf0] sm:$0xff]
    %v563 = vld [vmem:[%s3 + $0xf8] sm:$0xff]
    %v564 = vld [vmem:[%s4] sm:$0x1]
    %v566 = vlaneseq
    %v567 = vshrl.u32 %v566, 7
    %v568 = vsub.s32 0, %v567
    %v569 = vrot.slane %v564, %v568
    %571 = vmatprep.subr.mxu0 0.0
    %572 = vmatpush1.msra.mxu0 %v547
    %573 = vmatprep.subr.mxu0 0.0
    %574 = vmatpush1.msra.mxu0 %v546
    %575 = vmatprep.subr.mxu0 0.0
    %576 = vmatpush1.msra.mxu0 %v545
    %577 = vmatprep.subr.mxu0 0.0
    %578 = vmatpush1.msra.mxu0 %v544
    %579 = vmatprep.subr.mxu0 0.0
    %580 = vmatpush1.msra.mxu0 %v543
    %581 = vmatprep.subr.mxu0 0.0
    %582 = vmatpush1.msra.mxu0 %v542
    %583 = vmatprep.subr.mxu0 0.0
    %584 = vmatpush1.msra.mxu0 %v541
    %585 = vmatprep.subr.mxu0 0.0
    %586 = vmatpush1.msra.mxu0 %v540
    %587 = vmatprep.subr.mxu0 0.0
    %588 = vmatpush1.msra.mxu0 %v539
    %589 = vmatprep.subr.mxu0 0.0
    %590 = vmatpush1.msra.mxu0 %v538
    %591 = vmatprep.subr.mxu0 0.0
    %592 = vmatpush1.msra.mxu0 %v537
    %593 = vmatprep.subr.mxu0 0.0
    %594 = vmatpush1.msra.mxu0 %v536
    %595 = vmatprep.subr.mxu0 0.0
    %596 = vmatpush1.msra.mxu0 %v535
    %597 = vmatprep.subr.mxu0 0.0
    %598 = vmatpush1.msra.mxu0 %v534
    %599 = vmatprep.subr.mxu0 0.0
    %600 = vmatpush1.msra.mxu0 %v533
    %601 = vmatprep.subr.mxu0 0.0
    %602 = vmatpush1.msra.mxu0 %v532
    %603 = vmatprep.subr.mxu0 0.0
    %604 = vmatpush2.msra.mxu0 %v563
    %605 = vmatprep.subr.mxu0 0.0
    %606 = vmatpush2.msra.mxu0 %v562
    %607 = vmatprep.subr.mxu0 0.0
    %608 = vmatpush2.msra.mxu0 %v561
    %609 = vmatprep.subr.mxu0 0.0
    %610 = vmatpush2.msra.mxu0 %v560
    %611 = vmatprep.subr.mxu0 0.0
    %612 = vmatpush2.msra.mxu0 %v559
    %613 = vmatprep.subr.mxu0 0.0
    %614 = vmatpush2.msra.mxu0 %v558
    %615 = vmatprep.subr.mxu0 0.0
    %616 = vmatpush2.msra.mxu0 %v557
    %617 = vmatprep.subr.mxu0 0.0
    %618 = vmatpush2.msra.mxu0 %v556
    %619 = vmatprep.subr.mxu0 0.0
    %620 = vmatpush2.msra.mxu0 %v555
    %621 = vmatprep.subr.mxu0 0.0
    %622 = vmatpush2.msra.mxu0 %v554
    %623 = vmatprep.subr.mxu0 0.0
    %624 = vmatpush2.msra.mxu0 %v553
    %625 = vmatprep.subr.mxu0 0.0
    %626 = vmatpush2.msra.mxu0 %v552
    %627 = vmatprep.subr.mxu0 0.0
    %628 = vmatpush2.msra.mxu0 %v551
    %629 = vmatprep.subr.mxu0 0.0
    %630 = vmatpush2.msra.mxu0 %v550
    %631 = vmatprep.subr.mxu0 0.0
    %632 = vmatpush2.msra.mxu0 %v549
    %633 = vmatprep.subr.mxu0 0.0
    %634 = vmatpush2.msra.mxu0 %v548
    %635 = vmatprep.mubr.f32.mxu0 %v531
    %636 = vmatmul.mubr.f32.gmra.mxu0 %v530
    %v637 = vpop.f32.mrf.mxu0
    %v638 = vadd.f32 %v569, %v637
    %v639 = vpop.f32.mrf.mxu0
    %640 = vdwg.mxu0
    %v641 = vmax.f32 %v638, 0.0
    %v642 = vld [vmem:[%s5] sm:$0xff]
    %v643 = vld [vmem:[%s5 + $0x8] sm:$0xff]
    %v644 = vld [vmem:[%s5 + $0x10] sm:$0xff]
    %v645 = vld [vmem:[%s5 + $0x18] sm:$0xff]
    %v646 = vld [vmem:[%s5 + $0x20] sm:$0xff]
    %v647 = vld [vmem:[%s5 + $0x28] sm:$0xff]
    %v648 = vld [vmem:[%s5 + $0x30] sm:$0xff]
    %v649 = vld [vmem:[%s5 + $0x38] sm:$0xff]
    %v650 = vld [vmem:[%s5 + $0x40] sm:$0xff]
    %v651 = vld [vmem:[%s5 + $0x48] sm:$0xff]
    %v652 = vld [vmem:[%s5 + $0x50] sm:$0xff]
    %v653 = vld [vmem:[%s5 + $0x58] sm:$0xff]
    %v654 = vld [vmem:[%s5 + $0x60] sm:$0xff]
    %v655 = vld [vmem:[%s5 + $0x68] sm:$0xff]
    %v656 = vld [vmem:[%s5 + $0x70] sm:$0xff]
    %v657 = vld [vmem:[%s5 + $0x78] sm:$0xff]
    %v658 = vld [vmem:[%s6] sm:$0x1]
    %v660 = vlaneseq
    %v661 = vshrl.u32 %v660, 7
    %v662 = vsub.s32 0, %v661
    %v663 = vrot.slane %v658, %v662
    %665 = vmatprep.subr.mxu0 0.0
    %666 = vmatpush1.msra.mxu0 %v657
    %667 = vmatprep.subr.mxu0 0.0
    %668 = vmatpush1.msra.mxu0 %v656
    %669 = vmatprep.subr.mxu0 0.0
    %670 = vmatpush1.msra.mxu0 %v655
    %671 = vmatprep.subr.mxu0 0.0
    %672 = vmatpush1.msra.mxu0 %v654
    %673 = vmatprep.subr.mxu0 0.0
    %674 = vmatpush1.msra.mxu0 %v653
    %675 = vmatprep.subr.mxu0 0.0
    %676 = vmatpush1.msra.mxu0 %v652
    %677 = vmatprep.subr.mxu0 0.0
    %678 = vmatpush1.msra.mxu0 %v651
    %679 = vmatprep.subr.mxu0 0.0
    %680 = vmatpush1.msra.mxu0 %v650
    %681 = vmatprep.subr.mxu0 0.0
    %682 = vmatpush1.msra.mxu0 %v649
    %683 = vmatprep.subr.mxu0 0.0
    %684 = vmatpush1.msra.mxu0 %v648
    %685 = vmatprep.subr.mxu0 0.0
    %686 = vmatpush1.msra.mxu0 %v647
    %687 = vmatprep.subr.mxu0 0.0
    %688 = vmatpush1.msra.mxu0 %v646
    %689 = vmatprep.subr.mxu0 0.0
    %690 = vmatpush1.msra.mxu0 %v645
    %691 = vmatprep.subr.mxu0 0.0
    %692 = vmatpush1.msra.mxu0 %v644
    %693 = vmatprep.subr.mxu0 0.0
    %694 = vmatpush1.msra.mxu0 %v643
    %695 = vmatprep.subr.mxu0 0.0
    %696 = vmatpush1.msra.mxu0 %v642
    %697 = vmatprep.subr.mxu0 0.0
    %698 = vmatpush2.msra.mxu0 0.0
    %699 = vmatprep.subr.mxu0 0.0
    %700 = vmatpush2.msra.mxu0 0.0
    %701 = vmatprep.subr.mxu0 0.0
    %702 = vmatpush2.msra.mxu0 0.0
    %703 = vmatprep.subr.mxu0 0.0
    %704 = vmatpush2.msra.mxu0 0.0
    %705 = vmatprep.subr.mxu0 0.0
    %706 = vmatpush2.msra.mxu0 0.0
    %707 = vmatprep.subr.mxu0 0.0
    %708 = vmatpush2.msra.mxu0 0.0
    %709 = vmatprep.subr.mxu0 0.0
    %710 = vmatpush2.msra.mxu0 0.0
    %711 = vmatprep.subr.mxu0 0.0
    %712 = vmatpush2.msra.mxu0 0.0
    %713 = vmatprep.subr.mxu0 0.0
    %714 = vmatpush2.msra.mxu0 0.0
    %715 = vmatprep.subr.mxu0 0.0
    %716 = vmatpush2.msra.mxu0 0.0
    %717 = vmatprep.subr.mxu0 0.0
    %718 = vmatpush2.msra.mxu0 0.0
    %719 = vmatprep.subr.mxu0 0.0
    %720 = vmatpush2.msra.mxu0 0.0
    %721 = vmatprep.subr.mxu0 0.0
    %722 = vmatpush2.msra.mxu0 0.0
    %723 = vmatprep.subr.mxu0 0.0
    %724 = vmatpush2.msra.mxu0 0.0
    %725 = vmatprep.subr.mxu0 0.0
    %726 = vmatpush2.msra.mxu0 0.0
    %727 = vmatprep.subr.mxu0 0.0
    %728 = vmatpush2.msra.mxu0 0.0
    %729 = vmatprep.mubr.f32.mxu0 0.0
    %730 = vmatmul.mubr.f32.gmra.mxu0 %v641
    %v731 = vpop.f32.mrf.mxu0
    %v732 = vadd.f32 %v663, %v731
    %v733 = vpop.f32.mrf.mxu0
    %734 = vdwg.mxu0
    %v735 = vmax.f32 %v732, 0.0
    %736 = vst [vmem:[#allocation2] sm:$0xff] %v735
    // Predicated region
    $region30: #{encoder_forward.1} parent=1 // pred_check
      _
    $region31: #{encoder_forward.1} parent=1 // pred_check_branch
      %738 = sbr.rel (0) target = $region33
    $region32: #{encoder_forward.1} parent=1 // pred_region
      %s740 = ssub.s32 128, 128
      %741 = vsyncadd [#allocation3], %s740
      %s743 = sshll.u32 [#allocation2], 4
      %s744 = int_to_ptr.vmem [resolvable:$true] %s743
      %746 = dma.vmem_to_hbm [thread:$0]  %s744, 128, %s7, [#allocation3]
    $region33: #{encoder_forward.1} parent=1 // pred_fallthru
      _
    // Predicated region
    $region34: #{encoder_forward.1} parent=1 // pred_check
      _
    $region35: #{encoder_forward.1} parent=1 // pred_check_branch
      %748 = sbr.rel (0) target = $region37
    $region36: #{encoder_forward.1} parent=1 // pred_region
      %749 = dma.done [#allocation3], 128
    $region37: #{encoder_forward.1} parent=1 // pred_fallthru
      _
    %750 = vsyncpa [#allocation3], 1

</llo_original>
